<compile_context>
chip_gen: v7x
topology: tpu7x:2x2x1
jax: 0.10.0
libtpu: 0.0.40
codegen_flags: <defaults>
</compile_context>

<pallas_src>
import functools

import jax
import jax.numpy as jnp
from jax.experimental import pallas as pl
from jax.experimental.pallas import tpu as pltpu

LANES = 128
MAX_BLOCK_ROWS = 2048   # (2048, 128) f32 block = 1 MiB; well inside scoped VMEM on all gens
ROW_ALIGN = 32          # covers int8 (32,128) and f32 (8,128) native tiles


def _round_up(x, m):
    return ((x + m - 1) // m) * m


def _focal_terms(p_raw, t_raw, *, alpha, gamma):
    """Per-element focal loss.

    Assumes hard binary targets in {0, 1} — this is what the PyTorch module's
    `alpha.gather(0, targets.long())` requires anyway.
    """
    p = p_raw.astype(jnp.float32)
    t = t_raw.astype(jnp.float32)
    is_pos = t > 0.0

    # Probability of the true class -> a single log instead of log(p) and log(1-p).
    p_t = jnp.where(is_pos, p, 1.0 - p)
    ce = -jnp.maximum(jnp.log(p_t), -100.0)   # BCE with PyTorch's -100 log clamp
    pt = jnp.exp(-ce)                         # matches torch.exp(-ce) incl. clamp corner
    one_m_pt = 1.0 - pt

    g = float(gamma)
    if g == 0.0:
        mod = jnp.ones_like(one_m_pt)
    elif g == 1.0:
        mod = one_m_pt
    elif g == 2.0:
        mod = one_m_pt * one_m_pt
    elif g.is_integer() and 0.0 < g <= 8.0:
        mod = one_m_pt ** int(g)              # lowers to multiplies, no pow->exp/log pair
    else:
        mod = one_m_pt ** jnp.float32(g)

    # alpha.gather(0, targets.long()): index 0 -> alpha, index 1 -> 1 - alpha.
    alpha_t = jnp.where(is_pos, jnp.float32(1.0 - alpha), jnp.float32(alpha))
    return alpha_t * mod * ce


def _focal_sum_kernel(p_ref, t_ref, psum_ref, *, alpha, gamma):
    f = _focal_terms(p_ref[...], t_ref[...], alpha=alpha, gamma=gamma)
    # Sublane-reduce only (lane-vector partial sum); the tiny cross-lane reduce
    # happens in JAX on the (nblk, 128) output.
    psum_ref[...] = jnp.sum(f, axis=0, keepdims=True)


def _focal_elems_kernel(p_ref, t_ref, loss_ref, *, alpha, gamma):
    loss_ref[...] = _focal_terms(p_ref[...], t_ref[...], alpha=alpha, gamma=gamma)


def focal_loss(inputs, targets, *, alpha, gamma, reduce=True):
    """Pallas implementation of FocalLoss.forward (logits=False path)."""
    orig_shape = inputs.shape
    n = inputs.size

    p_flat = inputs.reshape(-1)                     # keep native dtype (f32 / bf16)
    t_flat = targets.reshape(-1).astype(jnp.int8)   # {0,1}; truncation == .long()

    rows_needed = pl.cdiv(n, LANES)
    block_rows = min(MAX_BLOCK_ROWS, _round_up(rows_needed, ROW_ALIGN))
    rows = _round_up(rows_needed, block_rows)
    n_pad = rows * LANES - n
    if n_pad:
        # p=1, t=1  ->  ce = 0 and (1 - pt)^gamma = 0  ->  exactly zero contribution.
        p_flat = jnp.concatenate([p_flat, jnp.ones((n_pad,), p_flat.dtype)])
        t_flat = jnp.concatenate([t_flat, jnp.ones((n_pad,), jnp.int8)])

    p2 = p_flat.reshape(rows, LANES)
    t2 = t_flat.reshape(rows, LANES)
    nblk = rows // block_rows

    in_specs = [
        pl.BlockSpec((block_rows, LANES), lambda i: (i, 0)),
        pl.BlockSpec((block_rows, LANES), lambda i: (i, 0)),
    ]
    cparams = pltpu.CompilerParams(
        dimension_semantics=("parallel",)  # fully parallel grid: megacore-friendly on v7x
    )

    if reduce:
        kernel = functools.partial(
            _focal_sum_kernel, alpha=float(alpha), gamma=float(gamma)
        )
        partials = pl.pallas_call(
            kernel,
            out_shape=jax.ShapeDtypeStruct((nblk, LANES), jnp.float32),
            grid_spec=pltpu.PrefetchScalarGridSpec(
                num_scalar_prefetch=0,
                grid=(nblk,),
                in_specs=in_specs,
                out_specs=pl.BlockSpec((1, LANES), lambda i: (i, 0)),
            ),
            compiler_params=cparams,
        )(p2, t2)
        # Tiny final reduction + mean over the TRUE element count (padding is zero).
        return jnp.sum(partials) / jnp.float32(n)

    kernel = functools.partial(
        _focal_elems_kernel, alpha=float(alpha), gamma=float(gamma)
    )
    loss = pl.pallas_call(
        kernel,
        out_shape=jax.ShapeDtypeStruct((rows, LANES), jnp.float32),
        grid_spec=pltpu.PrefetchScalarGridSpec(
            num_scalar_prefetch=0,
            grid=(nblk,),
            in_specs=in_specs,
            out_specs=pl.BlockSpec((block_rows, LANES), lambda i: (i, 0)),
        ),
        compiler_params=cparams,
    )(p2, t2)
    return loss.reshape(-1)[:n].reshape(orig_shape)


def _focal_loss_ref(inputs, targets, alpha, gamma, reduce=True):
    """Pure-JAX reference mirroring the PyTorch module."""
    p = inputs.astype(jnp.float32)
    t = targets.astype(jnp.float32)
    ce = -(t * jnp.maximum(jnp.log(p), -100.0)
           + (1.0 - t) * jnp.maximum(jnp.log(1.0 - p), -100.0))
    pt = jnp.exp(-ce)
    f = (1.0 - pt) ** gamma * ce
    alpha_t = jnp.where(t.astype(jnp.int32) == 0, alpha, 1.0 - alpha)
    f = alpha_t * f
    return jnp.mean(f) if reduce else f


if __name__ == "__main__":
    # Module hyper-parameters (deterministic, in-script).
    ALPHA, GAMMA = 0.25, 2.0

    key = jax.random.PRNGKey(0)
    k1, k2 = jax.random.split(key)
    N = 2000  # deliberately not a multiple of the tile size: exercises padding path

    inputs = jax.nn.sigmoid(jax.random.normal(k1, (N,), dtype=jnp.float32))   # probs in (0,1)
    targets = jax.random.bernoulli(k2, p=0.3, shape=(N,)).astype(jnp.float32)  # {0,1}

    out = focal_loss(inputs, targets, alpha=ALPHA, gamma=GAMMA, reduce=True)
    out = jax.block_until_ready(out)

    ref = _focal_loss_ref(inputs, targets, ALPHA, GAMMA, reduce=True)
    assert jnp.allclose(out, ref, rtol=1e-5, atol=1e-6), (out, ref)

    # Also exercise the reduce=False path.
    out_elems = jax.block_until_ready(
        focal_loss(inputs, targets, alpha=ALPHA, gamma=GAMMA, reduce=False)
    )
    ref_elems = _focal_loss_ref(inputs, targets, ALPHA, GAMMA, reduce=False)
    assert jnp.allclose(out_elems, ref_elems, rtol=1e-5, atol=1e-6)

    print("KERNEL_OK")
</pallas_src>

<mosaic_0001>
module attributes {stable_mosaic.version = 11 : i64} {
  func.func @_focal_sum_kernel(%arg0: i32, %arg1: memref<32x128xf32, #tpu.memory_space<vmem>>, %arg2: memref<32x128xi8, #tpu.memory_space<vmem>>, %arg3: memref<1x128xf32, #tpu.memory_space<vmem>>) attributes {dimension_semantics = [#tpu.dimension_semantics<parallel>], iteration_bounds = array<i64: 1>, scalar_prefetch = 0 : i64, scratch_operands = 0 : i64, tpu.core_type = #tpu.core_type<tc>, window_params = [{transform_indices = @transform_0, window_bounds = array<i64: 32, 128>}, {transform_indices = @transform_1, window_bounds = array<i64: 32, 128>}, {transform_indices = @transform_2, window_bounds = array<i64: 1, 128>}]} {
    %c0 = arith.constant 0 : index
    %c0_0 = arith.constant 0 : index
    %0 = vector.load %arg1[%c0, %c0_0] : memref<32x128xf32, #tpu.memory_space<vmem>>, vector<32x128xf32>
    %c0_1 = arith.constant 0 : index
    %c0_2 = arith.constant 0 : index
    %1 = vector.load %arg2[%c0_1, %c0_2] : memref<32x128xi8, #tpu.memory_space<vmem>>, vector<32x128xi8>
    %2 = arith.sitofp %1 : vector<32x128xi8> to vector<32x128xf32>
    %cst = arith.constant 0.000000e+00 : f32
    %3 = vector.broadcast %cst : f32 to vector<32x128xf32>
    %4 = arith.cmpf ogt, %2, %3 : vector<32x128xf32>
    %cst_3 = arith.constant 1.000000e+00 : f32
    %5 = vector.broadcast %cst_3 : f32 to vector<32x128xf32>
    %6 = arith.subf %5, %0 : vector<32x128xf32>
    %7 = arith.select %4, %0, %6 : vector<32x128xi1>, vector<32x128xf32>
    %8 = math.log %7 : vector<32x128xf32>
    %cst_4 = arith.constant -1.000000e+02 : f32
    %9 = vector.broadcast %cst_4 : f32 to vector<32x128xf32>
    %10 = arith.maximumf %8, %9 : vector<32x128xf32>
    %cst_5 = arith.constant 0.000000e+00 : f32
    %11 = vector.broadcast %cst_5 : f32 to vector<32x128xf32>
    %12 = arith.subf %11, %10 : vector<32x128xf32>
    %cst_6 = arith.constant 0.000000e+00 : f32
    %13 = vector.broadcast %cst_6 : f32 to vector<32x128xf32>
    %14 = arith.subf %13, %12 : vector<32x128xf32>
    %15 = math.exp %14 : vector<32x128xf32>
    %cst_7 = arith.constant 1.000000e+00 : f32
    %16 = vector.broadcast %cst_7 : f32 to vector<32x128xf32>
    %17 = arith.subf %16, %15 : vector<32x128xf32>
    %18 = arith.mulf %17, %17 : vector<32x128xf32>
    %cst_8 = arith.constant 7.500000e-01 : f32
    %cst_9 = arith.constant 2.500000e-01 : f32
    %19 = vector.broadcast %cst_8 : f32 to vector<32x128xf32>
    %20 = vector.broadcast %cst_9 : f32 to vector<32x128xf32>
    %21 = arith.select %4, %19, %20 : vector<32x128xi1>, vector<32x128xf32>
    %22 = arith.mulf %21, %18 : vector<32x128xf32>
    %23 = arith.mulf %22, %12 : vector<32x128xf32>
    %cst_10 = arith.constant dense<0.000000e+00> : vector<128xf32>
    %24 = vector.multi_reduction <add>, %23, %cst_10 [0] : vector<32x128xf32> to vector<128xf32>
    %25 = vector.shape_cast %24 : vector<128xf32> to vector<1x128xf32>
    %c0_11 = arith.constant 0 : index
    %c0_12 = arith.constant 0 : index
    %26 = vector.load %arg3[%c0_11, %c0_12] : memref<1x128xf32, #tpu.memory_space<vmem>>, vector<1x128xf32>
    tpu.vector_store %arg3[%c0_11, %c0_12], %25 {strides = array<i32>} : memref<1x128xf32, #tpu.memory_space<vmem>>, vector<1x128xf32>,
    return
  }
  func.func @transform_0(%arg0: i32) -> (i32, i32) {
    %c0_i32 = arith.constant 0 : i32
    %c0_i32_0 = arith.constant 0 : i32
    return %arg0, %c0_i32 : i32, i32
  }
  func.func @transform_1(%arg0: i32) -> (i32, i32) {
    %c0_i32 = arith.constant 0 : i32
    %c0_i32_0 = arith.constant 0 : i32
    return %arg0, %c0_i32 : i32, i32
  }
  func.func @transform_2(%arg0: i32) -> (i32, i32) {
    %c0_i32 = arith.constant 0 : i32
    %c0_i32_0 = arith.constant 0 : i32
    return %arg0, %c0_i32 : i32, i32
  }
}

</mosaic_0001>

<llo_original>
// kernel: tpu_custom_call.1
$region0: #{tpu_custom_call.1}
  #allocation0 [shape = 'u32[]', space=smem, size = 0x4, offset = 0x4, fixed_abs, tag = 'smem constant byte address 0x4 - core index']
  #allocation1 [shape = 'u32[144,128]{1,0:T(1,128)}', space=vmem, size = 0x12000, scoped, tag = 'internal scratch']
  %s0 = inlined_call_operand.hbm [shape: f32[32,128], index: 0, kind: input, shape index: {}]
  %s1 = inlined_call_operand.hbm [shape: s8[32,128], index: 1, kind: input, shape index: {}]
  %s2 = inlined_call_operand.hbm [shape: f32[1,128], index: 2, kind: output, shape index: {}]
  %s3 = sld [smem:[#allocation0]]
  $region26: #{tpu_custom_call.1} parent=0
    _
  %s5 = ssub.s32 1, %s3
  %s6 = scalar_select 0, %s5, %s3
  $region1: #{tpu_custom_call.1} parent=0
    #allocation2 [shape = 'u8[16384]{0}', space=vmem, size = 0x4000, scoped, tag = 'input window, operand 0, single buffered']
    #allocation3 [shape = 's32[1]{0}', space=sflag, size = 0x4, scoped, tag = 'scoped memory for tpu_custom_call.1']
    #allocation4 [shape = 's32[1]{0}', space=sflag, size = 0x4, scoped, tag = 'scoped memory for tpu_custom_call.1']
    #allocation5 [shape = 'u8[4096]{0}', space=vmem, size = 0x1000, scoped, tag = 'input window, operand 1, single buffered']
    #allocation6 [shape = 's32[1]{0}', space=sflag, size = 0x4, scoped, tag = 'scoped memory for tpu_custom_call.1']
    #allocation7 [shape = 'u8[512]{0}', space=vmem, size = 0x400, scoped, tag = 'output window, operand 0, single buffered']
    %7 = vsyncpa [#allocation3], 0
    %8 = vsyncpa [#allocation6], 0
    %9 = vsyncpa [#allocation4], 0
    // Predicated region
    $region2: #{tpu_custom_call.1} parent=1 // pred_check
      _
    $region3: #{tpu_custom_call.1} parent=1 // pred_check_branch
      %11 = sbr.rel (0) target = $region5
    $region4: #{tpu_custom_call.1} parent=1 // pred_region
      %s13 = ssub.s32 512, 512
      %14 = vsyncadd [#allocation3], %s13
      %s15 = sshll.u32 [#allocation2], 4
      %s16 = int_to_ptr.vmem [resolvable:$true] %s15
      %21 = dma.hbm_to_vmem [thread:$0]  %s0, 512, %s16, [#allocation3], 128, 128, 8
    $region5: #{tpu_custom_call.1} parent=1 // pred_fallthru
      _
    // Predicated region
    $region6: #{tpu_custom_call.1} parent=1 // pred_check
      _
    $region7: #{tpu_custom_call.1} parent=1 // pred_check_branch
      %23 = sbr.rel (0) target = $region9
    $region8: #{tpu_custom_call.1} parent=1 // pred_region
      %s25 = ssub.s32 128, 128
      %26 = vsyncadd [#allocation6], %s25
      %s28 = sshll.u32 [#allocation5], 4
      %s29 = int_to_ptr.vmem [resolvable:$true] %s28
      %31 = dma.hbm_to_vmem [thread:$0]  %s1, 128, %s29, [#allocation6]
    $region9: #{tpu_custom_call.1} parent=1 // pred_fallthru
      _
    // Predicated region
    $region10: #{tpu_custom_call.1} parent=1 // pred_check
      _
    $region11: #{tpu_custom_call.1} parent=1 // pred_check_branch
      %33 = sbr.rel (0) target = $region13
    $region12: #{tpu_custom_call.1} parent=1 // pred_region
      %34 = dma.done [#allocation3], 512
    $region13: #{tpu_custom_call.1} parent=1 // pred_fallthru
      _
    // Predicated region
    $region14: #{tpu_custom_call.1} parent=1 // pred_check
      _
    $region15: #{tpu_custom_call.1} parent=1 // pred_check_branch
      %36 = sbr.rel (0) target = $region17
    $region16: #{tpu_custom_call.1} parent=1 // pred_region
      %37 = dma.done [#allocation6], 128
    $region17: #{tpu_custom_call.1} parent=1 // pred_fallthru
      _
    %v38 = vld [vmem:[#allocation2] sm:$0xff]
    %v39 = vld [vmem:[#allocation2 + $0x8] sm:$0xff]
    %v40 = vld [vmem:[#allocation2 + $0x10] sm:$0xff]
    %v41 = vld [vmem:[#allocation2 + $0x18] sm:$0xff]
    %v42 = vld [vmem:[#allocation5] sm:$0xff]
    %v43 = vunpack.c.0.s8 %v42
    %v44 = vunpack.c.1.s8 %v42
    %v45 = vunpack.c.2.s8 %v42
    %v46 = vunpack.c.3.s8 %v42
    %v47 = vcvt.s32.f32 %v43
    %v48 = vcvt.s32.f32 %v44
    %v49 = vcvt.s32.f32 %v45
    %v50 = vcvt.s32.f32 %v46
    %vm51 = vcmp.gt.f32.partialorder %v47, 0.0
    %vm52 = vcmp.gt.f32.partialorder %v48, 0.0
    %vm53 = vcmp.gt.f32.partialorder %v49, 0.0
    %vm54 = vcmp.gt.f32.partialorder %v50, 0.0
    %v55 = vsub.f32 1.0, %v38
    %v56 = vsub.f32 1.0, %v39
    %v57 = vsub.f32 1.0, %v40
    %v58 = vsub.f32 1.0, %v41
    %v59 = vsel %vm51, %v38, %v55
    %v60 = vsel %vm52, %v39, %v56
    %v61 = vsel %vm53, %v40, %v57
    %v62 = vsel %vm54, %v41, %v58
    %v63 = vlog2.pop %v59
    %v64 = vmul.f32 %v63, 0.6931472
    %v65 = vlog2.pop %v60
    %v66 = vmul.f32 %v65, 0.6931472
    %v67 = vlog2.pop %v61
    %v68 = vmul.f32 %v67, 0.6931472
    %v69 = vlog2.pop %v62
    %v70 = vmul.f32 %v69, 0.6931472
    %v71 = vmax.f32 %v64, -100.0
    %v72 = vmax.f32 %v66, -100.0
    %v73 = vmax.f32 %v68, -100.0
    %v74 = vmax.f32 %v70, -100.0
    %v75 = vsub.f32 0.0, %v71
    %v76 = vsub.f32 0.0, %v72
    %v77 = vsub.f32 0.0, %v73
    %v78 = vsub.f32 0.0, %v74
    %v79 = vsub.f32 0.0, %v75
    %v80 = vsub.f32 0.0, %v76
    %v81 = vsub.f32 0.0, %v77
    %v82 = vsub.f32 0.0, %v78
    %v83 = vmul.f32 %v79, 1.442695
    %v84 = vpow.pop %v83
    %v85 = vmul.f32 %v80, 1.442695
    %v86 = vpow.pop %v85
    %v87 = vmul.f32 %v81, 1.442695
    %v88 = vpow.pop %v87
    %v89 = vmul.f32 %v82, 1.442695
    %v90 = vpow.pop %v89
    %v91 = vsub.f32 1.0, %v84
    %v92 = vsub.f32 1.0, %v86
    %v93 = vsub.f32 1.0, %v88
    %v94 = vsub.f32 1.0, %v90
    %v95 = vmul.f32 %v91, %v91
    %v96 = vmul.f32 %v92, %v92
    %v97 = vmul.f32 %v93, %v93
    %v98 = vmul.f32 %v94, %v94
    %v99 = vsel %vm51, 0.75, 0.25
    %v100 = vsel %vm52, 0.75, 0.25
    %v101 = vsel %vm53, 0.75, 0.25
    %v102 = vsel %vm54, 0.75, 0.25
    %v103 = vmul.f32 %v99, %v95
    %v104 = vmul.f32 %v100, %v96
    %v105 = vmul.f32 %v101, %v97
    %v106 = vmul.f32 %v102, %v98
    %v107 = vmul.f32 %v103, %v75
    %v108 = vmul.f32 %v104, %v76
    %v109 = vmul.f32 %v105, %v77
    %v110 = vmul.f32 %v106, %v78
    %v111 = vadd.f32 %v107, %v108
    %v112 = vadd.f32 %v111, %v109
    %v113 = vadd.f32 %v112, %v110
    %v114 = vrot.slane %v113, 4
    %v115 = vadd.f32 %v113, %v114
    %v116 = vrot.slane %v115, 2
    %v117 = vadd.f32 %v115, %v116
    %v118 = vrot.slane %v117, 1
    %v119 = vadd.f32 %v117, %v118
    %120 = vst [vmem:[#allocation7] sm:$0x1] %v119
    // Predicated region
    $region18: #{tpu_custom_call.1} parent=1 // pred_check
      _
    $region19: #{tpu_custom_call.1} parent=1 // pred_check_branch
      %122 = sbr.rel (0) target = $region21
    $region20: #{tpu_custom_call.1} parent=1 // pred_region
      %s124 = ssub.s32 16, 16
      %125 = vsyncadd [#allocation4], %s124
      %s127 = sshll.u32 [#allocation7], 4
      %s128 = int_to_ptr.vmem [resolvable:$true] %s127
      %130 = dma.vmem_to_hbm [thread:$0]  %s128, 16, %s2, [#allocation4]
    $region21: #{tpu_custom_call.1} parent=1 // pred_fallthru
      _
    // Predicated region
    $region22: #{tpu_custom_call.1} parent=1 // pred_check
      _
    $region23: #{tpu_custom_call.1} parent=1 // pred_check_branch
      %132 = sbr.rel (0) target = $region25
    $region24: #{tpu_custom_call.1} parent=1 // pred_region
      %133 = dma.done [#allocation4], 16
    $region25: #{tpu_custom_call.1} parent=1 // pred_fallthru
      _
    %134 = vsyncpa [#allocation3], 1
    %135 = vsyncpa [#allocation6], 1
    %136 = vsyncpa [#allocation4], 1

</llo_original>
